<compile_context>
chip_gen: v5e
topology: v5e:2x2
jax: 0.10.0
libtpu: 0.0.40
codegen_flags: <defaults>
</compile_context>

<pallas_src>
import functools

import jax
import jax.numpy as jnp
import numpy as np
from jax.experimental import pallas as pl
from jax.experimental.pallas import tpu as pltpu

# ---------------- configuration (small, consistent with the module) ----------
B = 2          # batch
N = 8          # sequence length (tokens)
DIM = 32       # embedding dim
NUM_HEADS = 8  # heads -> head_dim = 4
MLP_RATIO = 4.0
MLP_HIDDEN = int(DIM * MLP_RATIO)  # 128
LN_EPS = 1e-5
VEC_W = 128    # packed small-vector row width (lane-aligned, >= max(DIM, MLP_HIDDEN))
LANE = 128     # TPU lane width (padding unit for the packed weight slab)


def _round_up(x, m):
    return (x + m - 1) // m * m


def _layernorm(v, gamma, beta):
    mu = jnp.mean(v, axis=-1, keepdims=True)
    var = jnp.mean((v - mu) ** 2, axis=-1, keepdims=True)
    return (v - mu) * jax.lax.rsqrt(var + LN_EPS) * gamma + beta


def _gelu_tanh(v):
    # tanh-approx GELU: one EUP tanh instead of the long erf VALU polynomial.
    # |diff| vs torch's exact erf GELU is ~1e-3 worst case -> inside test tol.
    return 0.5 * v * (1.0 + jnp.tanh(0.7978845608028654 * (v + 0.044715 * v * v * v)))


def _encoder_block_kernel(
    x_ref,      # (B*N, C)              f32
    vec_ref,    # (8, VEC_W)            f32: ln1_g, ln1_b, bproj, ln2_g, ln2_b, b2, b1, 0
    wcat_ref,   # (C, 3*Cp + Cp + Hm)   bf16: [wq|pad, wk|pad, wv|pad, wproj|pad, w1]
    w2_ref,     # (Hm, C)               bf16
    o_ref,      # (B*N, C)              f32
    *, batch, num_heads,
):
    xs = x_ref[...]                     # (B*N, C)
    bn, c = xs.shape
    seq = bn // batch
    head_dim = c // num_heads
    h_mlp = w2_ref.shape[0]
    cpad = _round_up(c, LANE)           # 128-lane band per packed sub-matrix

    vecs = vec_ref[...]
    ln1_g, ln1_b = vecs[0:1, :c], vecs[1:2, :c]
    bproj = vecs[2:3, :c]
    ln2_g, ln2_b = vecs[3:4, :c], vecs[4:5, :c]
    b2 = vecs[5:6, :c]
    b1 = vecs[6:7, :h_mlp]

    wcat = wcat_ref[...]
    wqkv = wcat[:, 0:3 * cpad]                       # lane-aligned slices only
    wproj = wcat[:, 3 * cpad:3 * cpad + c]
    w1 = wcat[:, 4 * cpad:4 * cpad + h_mlp]

    # ---- LayerNorm 1 (f32) ----
    x1 = _layernorm(xs, ln1_g, ln1_b)                                # (B*N, C)

    # ---- QKV projection (1/sqrt(head_dim) pre-folded into the q columns) ----
    qkv = jnp.dot(x1.astype(jnp.bfloat16), wqkv,
                  preferred_element_type=jnp.float32)                # (B*N, 3*cpad)
    q3 = qkv[:, 0 * cpad:0 * cpad + c].reshape(batch, seq, c)
    k3 = qkv[:, 1 * cpad:1 * cpad + c].reshape(batch, seq, c)
    v3 = qkv[:, 2 * cpad:2 * cpad + c].reshape(batch, seq, c)

    # ---- head-batched attention via a masked full-width contraction ----
    # Row x = h*seq + n holds head h / token n.  Masking the replicated q rows
    # to their own head's channels makes the full-C contraction equal to the
    # per-head (N, Dh) x (Dh, N) product.
    lane_idx = jax.lax.broadcasted_iota(jnp.int32, (1, c), 1)
    head_masks = [
        jnp.where((lane_idx >= h * head_dim) & (lane_idx < (h + 1) * head_dim),
                  1.0, 0.0)
        for h in range(num_heads)
    ]                                                                # each (1, C) f32

    qm = jnp.concatenate(
        [q3 * head_masks[h][None, :, :] for h in range(num_heads)],
        axis=1)                                                      # (B, H*N, C)

    s = jnp.einsum('bxc,bmc->bxm',
                   qm.astype(jnp.bfloat16), k3.astype(jnp.bfloat16),
                   preferred_element_type=jnp.float32)               # (B, H*N, N)
    s = s - jnp.max(s, axis=-1, keepdims=True)
    e = jnp.exp(s)
    p = e * pl.reciprocal(jnp.sum(e, axis=-1, keepdims=True), approx=True)

    ctx = jnp.einsum('bxm,bmc->bxc',
                     p.astype(jnp.bfloat16), v3.astype(jnp.bfloat16),
                     preferred_element_type=jnp.float32)             # (B, H*N, C)

    # Head channel blocks are disjoint -> masked sum over the H row-groups
    # reassembles (B, N, C) without any lane-level concat.
    attn3 = ctx[:, 0:seq, :] * head_masks[0][None, :, :]
    for h in range(1, num_heads):
        attn3 = attn3 + ctx[:, h * seq:(h + 1) * seq, :] * head_masks[h][None, :, :]
    attn_out = attn3.reshape(bn, c)

    proj = jnp.dot(attn_out.astype(jnp.bfloat16), wproj,
                   preferred_element_type=jnp.float32) + bproj
    x2 = proj + x1           # Residual wraps the post-norm value in this module.

    # ---- LayerNorm 2 (f32) ----
    x3 = _layernorm(x2, ln2_g, ln2_b)

    # ---- MLP (fc1 -> GELU -> fc2) + residual (adds post-norm x3) ----
    h1 = jnp.dot(x3.astype(jnp.bfloat16), w1,
                 preferred_element_type=jnp.float32) + b1
    g = _gelu_tanh(h1)
    y = jnp.dot(g.astype(jnp.bfloat16), w2_ref[...],
                preferred_element_type=jnp.float32) + b2
    o_ref[...] = y + x3


def prepare_params(params, *, num_heads=NUM_HEADS):
    """One-time host-side weight prep (hoisted out of the per-call path).

    * folds the 1/sqrt(head_dim) scale into the q columns of wqkv,
    * packs the 7 small gamma/beta/bias vectors into a single (8, 128) block,
    * pads wq/wk/wv/wproj to 128-lane bands and concatenates them with w1 into
      one bf16 slab (lane-aligned slices inside the kernel, fewer DMAs),
    * casts all MXU operands to bf16.
    """
    c = params["wqkv"].shape[0]
    h_mlp = params["w1"].shape[1]
    assert c % num_heads == 0 and c <= VEC_W and h_mlp <= VEC_W
    scale = (c // num_heads) ** (-0.5)
    cpad = _round_up(c, LANE)

    def pad_row(v):
        v = jnp.asarray(v, jnp.float32).reshape(-1)
        return jnp.pad(v, (0, VEC_W - v.shape[0]))

    vec = jnp.stack([
        pad_row(params["ln1_g"]), pad_row(params["ln1_b"]),
        pad_row(params["bproj"]),
        pad_row(params["ln2_g"]), pad_row(params["ln2_b"]),
        pad_row(params["b2"]), pad_row(params["b1"]),
        jnp.zeros((VEC_W,), jnp.float32),
    ])                                                         # (8, 128) f32

    def pad_cols(w, width):
        return jnp.pad(jnp.asarray(w, jnp.float32), ((0, 0), (0, width - w.shape[1])))

    wqkv = jnp.asarray(params["wqkv"], jnp.float32)
    wq = wqkv[:, 0 * c:1 * c] * scale          # fold attention scale into q
    wk = wqkv[:, 1 * c:2 * c]
    wv = wqkv[:, 2 * c:3 * c]
    wcat = jnp.concatenate([
        pad_cols(wq, cpad), pad_cols(wk, cpad), pad_cols(wv, cpad),
        pad_cols(params["wproj"], cpad),
        jnp.asarray(params["w1"], jnp.float32),
    ], axis=1).astype(jnp.bfloat16)                            # (C, 4*cpad + h_mlp)
    w2 = jnp.asarray(params["w2"], jnp.bfloat16)               # (h_mlp, C)
    return {"vec": vec, "wcat": wcat, "w2": w2}


def transformer_encoder_block(x, prep, *, num_heads=NUM_HEADS):
    b, n, c = x.shape
    assert c % num_heads == 0
    kernel = functools.partial(_encoder_block_kernel, batch=b, num_heads=num_heads)
    vmem = pltpu.MemorySpace.VMEM
    # Single invocation (no grid): every operand is a whole-array VMEM block
    # (total footprint ~tens of KB), so 4 input DMAs + 1 output DMA total.
    out2d = pl.pallas_call(
        kernel,
        out_shape=jax.ShapeDtypeStruct((b * n, c), jnp.float32),
        in_specs=[pl.BlockSpec(memory_space=vmem)] * 4,
        out_specs=pl.BlockSpec(memory_space=vmem),
    )(x.reshape(b * n, c), prep["vec"], prep["wcat"], prep["w2"])
    return out2d.reshape(b, n, c)


# ---------------- pure-JAX reference (mirrors the PyTorch forward, f32) ------
def reference_block(x, p, num_heads=NUM_HEADS):
    b, n, c = x.shape
    hd = c // num_heads
    scale = hd ** (-0.5)

    def ln(v, g, bta):
        mu = jnp.mean(v, axis=-1, keepdims=True)
        var = jnp.mean((v - mu) ** 2, axis=-1, keepdims=True)
        return (v - mu) / jnp.sqrt(var + LN_EPS) * g + bta

    x1 = ln(x, p["ln1_g"][0], p["ln1_b"][0])
    qkv = x1 @ p["wqkv"]                                   # (B, N, 3C)
    qkv = qkv.reshape(b, n, 3, num_heads, hd).transpose(2, 0, 3, 1, 4)
    q, k, v = qkv[0], qkv[1], qkv[2]                        # (B, H, N, Dh)
    attn = (q @ jnp.swapaxes(k, -2, -1)) * scale
    attn = jax.nn.softmax(attn, axis=-1)
    ao = (attn @ v).transpose(0, 2, 1, 3).reshape(b, n, c)
    x2 = ao @ p["wproj"] + p["bproj"][0] + x1
    x3 = ln(x2, p["ln2_g"][0], p["ln2_b"][0])
    hcur = x3 @ p["w1"] + p["b1"][0]
    hcur = 0.5 * hcur * (1.0 + jax.lax.erf(hcur * 0.7071067811865476))  # exact GELU
    return hcur @ p["w2"] + p["b2"][0] + x3


def make_params(key):
    ks = jax.random.split(key, 10)
    s = 0.02
    return {
        "ln1_g": 1.0 + s * jax.random.normal(ks[0], (1, DIM), jnp.float32),
        "ln1_b": s * jax.random.normal(ks[1], (1, DIM), jnp.float32),
        "wqkv": s * jax.random.normal(ks[2], (DIM, 3 * DIM), jnp.float32),
        "wproj": s * jax.random.normal(ks[3], (DIM, DIM), jnp.float32),
        "bproj": s * jax.random.normal(ks[4], (1, DIM), jnp.float32),
        "ln2_g": 1.0 + s * jax.random.normal(ks[5], (1, DIM), jnp.float32),
        "ln2_b": s * jax.random.normal(ks[6], (1, DIM), jnp.float32),
        "w1": s * jax.random.normal(ks[7], (DIM, MLP_HIDDEN), jnp.float32),
        "b1": s * jax.random.normal(ks[8], (1, MLP_HIDDEN), jnp.float32),
        "w2": s * jax.random.normal(ks[9], (MLP_HIDDEN, DIM), jnp.float32),
        "b2": jnp.zeros((1, DIM), jnp.float32),
    }


if __name__ == "__main__":
    key = jax.random.PRNGKey(0)
    kx, kp = jax.random.split(key)
    x = jax.random.normal(kx, (B, N, DIM), jnp.float32)
    params = make_params(kp)

    prep = prepare_params(params)          # one-time host-side prep (not per call)
    fwd = jax.jit(transformer_encoder_block)

    out = jax.block_until_ready(fwd(x, prep))

    ref = reference_block(x, params)
    np.testing.assert_allclose(np.asarray(out), np.asarray(ref), rtol=2e-2, atol=2e-2)
    assert out.shape == (B, N, DIM)
    print("KERNEL_OK")
</pallas_src>

<mosaic_0001>
module attributes {stable_mosaic.version = 11 : i64} {
  func.func @_encoder_block_kernel(%arg0: memref<16x32xf32, #tpu.memory_space<vmem>>, %arg1: memref<8x128xf32, #tpu.memory_space<vmem>>, %arg2: memref<32x640xbf16, #tpu.memory_space<vmem>>, %arg3: memref<128x32xbf16, #tpu.memory_space<vmem>>, %arg4: memref<16x32xf32, #tpu.memory_space<vmem>>) attributes {dimension_semantics = [], scalar_prefetch = 0 : i64, scratch_operands = 0 : i64, tpu.core_type = #tpu.core_type<tc>} {
    %c0 = arith.constant 0 : index
    %c0_0 = arith.constant 0 : index
    %0 = vector.load %arg0[%c0, %c0_0] : memref<16x32xf32, #tpu.memory_space<vmem>>, vector<16x32xf32>
    %c0_1 = arith.constant 0 : index
    %c0_2 = arith.constant 0 : index
    %1 = vector.load %arg1[%c0_1, %c0_2] : memref<8x128xf32, #tpu.memory_space<vmem>>, vector<8x128xf32>
    %2 = vector.extract_strided_slice %1 {offsets = [0, 0], sizes = [1, 32], strides = [1, 1]} : vector<8x128xf32> to vector<1x32xf32>
    %3 = vector.extract_strided_slice %1 {offsets = [1, 0], sizes = [1, 32], strides = [1, 1]} : vector<8x128xf32> to vector<1x32xf32>
    %4 = vector.extract_strided_slice %1 {offsets = [2, 0], sizes = [1, 32], strides = [1, 1]} : vector<8x128xf32> to vector<1x32xf32>
    %5 = vector.extract_strided_slice %1 {offsets = [3, 0], sizes = [1, 32], strides = [1, 1]} : vector<8x128xf32> to vector<1x32xf32>
    %6 = vector.extract_strided_slice %1 {offsets = [4, 0], sizes = [1, 32], strides = [1, 1]} : vector<8x128xf32> to vector<1x32xf32>
    %7 = vector.extract_strided_slice %1 {offsets = [5, 0], sizes = [1, 32], strides = [1, 1]} : vector<8x128xf32> to vector<1x32xf32>
    %8 = vector.extract_strided_slice %1 {offsets = [6, 0], sizes = [1, 128], strides = [1, 1]} : vector<8x128xf32> to vector<1x128xf32>
    %c0_3 = arith.constant 0 : index
    %c0_4 = arith.constant 0 : index
    %9 = vector.load %arg2[%c0_3, %c0_4] : memref<32x640xbf16, #tpu.memory_space<vmem>>, vector<32x640xbf16>
    %10 = vector.extract_strided_slice %9 {offsets = [0, 0], sizes = [32, 384], strides = [1, 1]} : vector<32x640xbf16> to vector<32x384xbf16>
    %11 = vector.extract_strided_slice %9 {offsets = [0, 384], sizes = [32, 32], strides = [1, 1]} : vector<32x640xbf16> to vector<32x32xbf16>
    %12 = vector.extract_strided_slice %9 {offsets = [0, 512], sizes = [32, 128], strides = [1, 1]} : vector<32x640xbf16> to vector<32x128xbf16>
    %cst = arith.constant dense<0.000000e+00> : vector<16xf32>
    %13 = vector.multi_reduction <add>, %0, %cst [1] : vector<16x32xf32> to vector<16xf32>
    %14 = vector.shape_cast %13 : vector<16xf32> to vector<16x1xf32>
    %cst_5 = arith.constant 3.200000e+01 : f32
    %15 = vector.broadcast %cst_5 : f32 to vector<16x1xf32>
    %16 = arith.divf %14, %15 : vector<16x1xf32>
    %17 = vector.broadcast %16 : vector<16x1xf32> to vector<16x32xf32>
    %18 = arith.subf %0, %17 : vector<16x32xf32>
    %19 = arith.mulf %18, %18 : vector<16x32xf32>
    %cst_6 = arith.constant dense<0.000000e+00> : vector<16xf32>
    %20 = vector.multi_reduction <add>, %19, %cst_6 [1] : vector<16x32xf32> to vector<16xf32>
    %21 = vector.shape_cast %20 : vector<16xf32> to vector<16x1xf32>
    %cst_7 = arith.constant 3.200000e+01 : f32
    %22 = vector.broadcast %cst_7 : f32 to vector<16x1xf32>
    %23 = arith.divf %21, %22 : vector<16x1xf32>
    %24 = vector.broadcast %16 : vector<16x1xf32> to vector<16x32xf32>
    %25 = arith.subf %0, %24 : vector<16x32xf32>
    %cst_8 = arith.constant 9.99999974E-6 : f32
    %26 = vector.broadcast %cst_8 : f32 to vector<16x1xf32>
    %27 = arith.addf %23, %26 : vector<16x1xf32>
    %28 = math.rsqrt %27 : vector<16x1xf32>
    %29 = vector.broadcast %28 : vector<16x1xf32> to vector<16x32xf32>
    %30 = arith.mulf %25, %29 : vector<16x32xf32>
    %31 = vector.broadcast %2 : vector<1x32xf32> to vector<16x32xf32>
    %32 = arith.mulf %30, %31 : vector<16x32xf32>
    %33 = vector.broadcast %3 : vector<1x32xf32> to vector<16x32xf32>
    %34 = arith.addf %32, %33 : vector<16x32xf32>
    %35 = arith.truncf %34 : vector<16x32xf32> to vector<16x32xbf16>
    %cst_9 = arith.constant dense<0.000000e+00> : vector<16x384xf32>
    %36 = tpu.matmul %35, %10, %cst_9 {dimension_numbers = #tpu.dot_dimension_numbers<[1], [0], [0], [1], [0, 0, 1, 1], [], []>} : vector<16x32xbf16>, vector<32x384xbf16>, vector<16x384xf32> -> vector<16x384xf32>
    %37 = vector.extract_strided_slice %36 {offsets = [0, 0], sizes = [16, 32], strides = [1, 1]} : vector<16x384xf32> to vector<16x32xf32>
    %38 = vector.shape_cast %37 : vector<16x32xf32> to vector<2x8x32xf32>
    %39 = vector.extract_strided_slice %36 {offsets = [0, 128], sizes = [16, 32], strides = [1, 1]} : vector<16x384xf32> to vector<16x32xf32>
    %40 = vector.shape_cast %39 : vector<16x32xf32> to vector<2x8x32xf32>
    %41 = vector.extract_strided_slice %36 {offsets = [0, 256], sizes = [16, 32], strides = [1, 1]} : vector<16x384xf32> to vector<16x32xf32>
    %42 = vector.shape_cast %41 : vector<16x32xf32> to vector<2x8x32xf32>
    %43 = tpu.iota {dimensions = array<i32: 1>} : vector<1x32xi32>
    %c0_i32 = arith.constant 0 : i32
    %44 = vector.broadcast %c0_i32 : i32 to vector<1x32xi32>
    %45 = arith.cmpi sge, %43, %44 : vector<1x32xi32>
    %c4_i32 = arith.constant 4 : i32
    %46 = vector.broadcast %c4_i32 : i32 to vector<1x32xi32>
    %47 = arith.cmpi slt, %43, %46 : vector<1x32xi32>
    %48 = arith.andi %45, %47 : vector<1x32xi1>
    %cst_10 = arith.constant 1.000000e+00 : f32
    %cst_11 = arith.constant 0.000000e+00 : f32
    %49 = vector.broadcast %cst_10 : f32 to vector<1x32xf32>
    %50 = vector.broadcast %cst_11 : f32 to vector<1x32xf32>
    %51 = arith.select %48, %49, %50 : vector<1x32xi1>, vector<1x32xf32>
    %c4_i32_12 = arith.constant 4 : i32
    %52 = vector.broadcast %c4_i32_12 : i32 to vector<1x32xi32>
    %53 = arith.cmpi sge, %43, %52 : vector<1x32xi32>
    %c8_i32 = arith.constant 8 : i32
    %54 = vector.broadcast %c8_i32 : i32 to vector<1x32xi32>
    %55 = arith.cmpi slt, %43, %54 : vector<1x32xi32>
    %56 = arith.andi %53, %55 : vector<1x32xi1>
    %cst_13 = arith.constant 1.000000e+00 : f32
    %cst_14 = arith.constant 0.000000e+00 : f32
    %57 = vector.broadcast %cst_13 : f32 to vector<1x32xf32>
    %58 = vector.broadcast %cst_14 : f32 to vector<1x32xf32>
    %59 = arith.select %56, %57, %58 : vector<1x32xi1>, vector<1x32xf32>
    %c8_i32_15 = arith.constant 8 : i32
    %60 = vector.broadcast %c8_i32_15 : i32 to vector<1x32xi32>
    %61 = arith.cmpi sge, %43, %60 : vector<1x32xi32>
    %c12_i32 = arith.constant 12 : i32
    %62 = vector.broadcast %c12_i32 : i32 to vector<1x32xi32>
    %63 = arith.cmpi slt, %43, %62 : vector<1x32xi32>
    %64 = arith.andi %61, %63 : vector<1x32xi1>
    %cst_16 = arith.constant 1.000000e+00 : f32
    %cst_17 = arith.constant 0.000000e+00 : f32
    %65 = vector.broadcast %cst_16 : f32 to vector<1x32xf32>
    %66 = vector.broadcast %cst_17 : f32 to vector<1x32xf32>
    %67 = arith.select %64, %65, %66 : vector<1x32xi1>, vector<1x32xf32>
    %c12_i32_18 = arith.constant 12 : i32
    %68 = vector.broadcast %c12_i32_18 : i32 to vector<1x32xi32>
    %69 = arith.cmpi sge, %43, %68 : vector<1x32xi32>
    %c16_i32 = arith.constant 16 : i32
    %70 = vector.broadcast %c16_i32 : i32 to vector<1x32xi32>
    %71 = arith.cmpi slt, %43, %70 : vector<1x32xi32>
    %72 = arith.andi %69, %71 : vector<1x32xi1>
    %cst_19 = arith.constant 1.000000e+00 : f32
    %cst_20 = arith.constant 0.000000e+00 : f32
    %73 = vector.broadcast %cst_19 : f32 to vector<1x32xf32>
    %74 = vector.broadcast %cst_20 : f32 to vector<1x32xf32>
    %75 = arith.select %72, %73, %74 : vector<1x32xi1>, vector<1x32xf32>
    %c16_i32_21 = arith.constant 16 : i32
    %76 = vector.broadcast %c16_i32_21 : i32 to vector<1x32xi32>
    %77 = arith.cmpi sge, %43, %76 : vector<1x32xi32>
    %c20_i32 = arith.constant 20 : i32
    %78 = vector.broadcast %c20_i32 : i32 to vector<1x32xi32>
    %79 = arith.cmpi slt, %43, %78 : vector<1x32xi32>
    %80 = arith.andi %77, %79 : vector<1x32xi1>
    %cst_22 = arith.constant 1.000000e+00 : f32
    %cst_23 = arith.constant 0.000000e+00 : f32
    %81 = vector.broadcast %cst_22 : f32 to vector<1x32xf32>
    %82 = vector.broadcast %cst_23 : f32 to vector<1x32xf32>
    %83 = arith.select %80, %81, %82 : vector<1x32xi1>, vector<1x32xf32>
    %c20_i32_24 = arith.constant 20 : i32
    %84 = vector.broadcast %c20_i32_24 : i32 to vector<1x32xi32>
    %85 = arith.cmpi sge, %43, %84 : vector<1x32xi32>
    %c24_i32 = arith.constant 24 : i32
    %86 = vector.broadcast %c24_i32 : i32 to vector<1x32xi32>
    %87 = arith.cmpi slt, %43, %86 : vector<1x32xi32>
    %88 = arith.andi %85, %87 : vector<1x32xi1>
    %cst_25 = arith.constant 1.000000e+00 : f32
    %cst_26 = arith.constant 0.000000e+00 : f32
    %89 = vector.broadcast %cst_25 : f32 to vector<1x32xf32>
    %90 = vector.broadcast %cst_26 : f32 to vector<1x32xf32>
    %91 = arith.select %88, %89, %90 : vector<1x32xi1>, vector<1x32xf32>
    %c24_i32_27 = arith.constant 24 : i32
    %92 = vector.broadcast %c24_i32_27 : i32 to vector<1x32xi32>
    %93 = arith.cmpi sge, %43, %92 : vector<1x32xi32>
    %c28_i32 = arith.constant 28 : i32
    %94 = vector.broadcast %c28_i32 : i32 to vector<1x32xi32>
    %95 = arith.cmpi slt, %43, %94 : vector<1x32xi32>
    %96 = arith.andi %93, %95 : vector<1x32xi1>
    %cst_28 = arith.constant 1.000000e+00 : f32
    %cst_29 = arith.constant 0.000000e+00 : f32
    %97 = vector.broadcast %cst_28 : f32 to vector<1x32xf32>
    %98 = vector.broadcast %cst_29 : f32 to vector<1x32xf32>
    %99 = arith.select %96, %97, %98 : vector<1x32xi1>, vector<1x32xf32>
    %c28_i32_30 = arith.constant 28 : i32
    %100 = vector.broadcast %c28_i32_30 : i32 to vector<1x32xi32>
    %101 = arith.cmpi sge, %43, %100 : vector<1x32xi32>
    %c32_i32 = arith.constant 32 : i32
    %102 = vector.broadcast %c32_i32 : i32 to vector<1x32xi32>
    %103 = arith.cmpi slt, %43, %102 : vector<1x32xi32>
    %104 = arith.andi %101, %103 : vector<1x32xi1>
    %cst_31 = arith.constant 1.000000e+00 : f32
    %cst_32 = arith.constant 0.000000e+00 : f32
    %105 = vector.broadcast %cst_31 : f32 to vector<1x32xf32>
    %106 = vector.broadcast %cst_32 : f32 to vector<1x32xf32>
    %107 = arith.select %104, %105, %106 : vector<1x32xi1>, vector<1x32xf32>
    %108 = vector.shape_cast %51 : vector<1x32xf32> to vector<1x1x32xf32>
    %109 = vector.broadcast %108 : vector<1x1x32xf32> to vector<2x8x32xf32>
    %110 = arith.mulf %38, %109 : vector<2x8x32xf32>
    %111 = vector.shape_cast %59 : vector<1x32xf32> to vector<1x1x32xf32>
    %112 = vector.broadcast %111 : vector<1x1x32xf32> to vector<2x8x32xf32>
    %113 = arith.mulf %38, %112 : vector<2x8x32xf32>
    %114 = vector.shape_cast %67 : vector<1x32xf32> to vector<1x1x32xf32>
    %115 = vector.broadcast %114 : vector<1x1x32xf32> to vector<2x8x32xf32>
    %116 = arith.mulf %38, %115 : vector<2x8x32xf32>
    %117 = vector.shape_cast %75 : vector<1x32xf32> to vector<1x1x32xf32>
    %118 = vector.broadcast %117 : vector<1x1x32xf32> to vector<2x8x32xf32>
    %119 = arith.mulf %38, %118 : vector<2x8x32xf32>
    %120 = vector.shape_cast %83 : vector<1x32xf32> to vector<1x1x32xf32>
    %121 = vector.broadcast %120 : vector<1x1x32xf32> to vector<2x8x32xf32>
    %122 = arith.mulf %38, %121 : vector<2x8x32xf32>
    %123 = vector.shape_cast %91 : vector<1x32xf32> to vector<1x1x32xf32>
    %124 = vector.broadcast %123 : vector<1x1x32xf32> to vector<2x8x32xf32>
    %125 = arith.mulf %38, %124 : vector<2x8x32xf32>
    %126 = vector.shape_cast %99 : vector<1x32xf32> to vector<1x1x32xf32>
    %127 = vector.broadcast %126 : vector<1x1x32xf32> to vector<2x8x32xf32>
    %128 = arith.mulf %38, %127 : vector<2x8x32xf32>
    %129 = vector.shape_cast %107 : vector<1x32xf32> to vector<1x1x32xf32>
    %130 = vector.broadcast %129 : vector<1x1x32xf32> to vector<2x8x32xf32>
    %131 = arith.mulf %38, %130 : vector<2x8x32xf32>
    %132 = tpu.concatenate %110, %113, %116, %119, %122, %125, %128, %131 in 1 : vector<2x8x32xf32>, vector<2x8x32xf32>, vector<2x8x32xf32>, vector<2x8x32xf32>, vector<2x8x32xf32>, vector<2x8x32xf32>, vector<2x8x32xf32>, vector<2x8x32xf32> -> vector<2x64x32xf32>
    %133 = arith.truncf %132 : vector<2x64x32xf32> to vector<2x64x32xbf16>
    %134 = arith.truncf %40 : vector<2x8x32xf32> to vector<2x8x32xbf16>
    "tpu.trace_start"() <{level = 10 : i32, message = "bxc,bmc->bxm"}> : () -> ()
    %cst_33 = arith.constant dense<0.000000e+00> : vector<2x64x8xf32>
    %135 = tpu.matmul %133, %134, %cst_33 {dimension_numbers = #tpu.dot_dimension_numbers<[2], [2], [1], [1], [0, 0, 0, 1, 1, 1], [0], [0]>} : vector<2x64x32xbf16>, vector<2x8x32xbf16>, vector<2x64x8xf32> -> vector<2x64x8xf32>
    "tpu.trace_stop"() : () -> ()
    %cst_34 = arith.constant dense<0xFF800000> : vector<2x64xf32>
    %136 = vector.multi_reduction <maximumf>, %135, %cst_34 [2] : vector<2x64x8xf32> to vector<2x64xf32>
    %137 = vector.shape_cast %136 : vector<2x64xf32> to vector<2x64x1xf32>
    %138 = vector.broadcast %137 : vector<2x64x1xf32> to vector<2x64x8xf32>
    %139 = arith.subf %135, %138 : vector<2x64x8xf32>
    %140 = math.exp %139 : vector<2x64x8xf32>
    %cst_35 = arith.constant dense<0.000000e+00> : vector<2x64xf32>
    %141 = vector.multi_reduction <add>, %140, %cst_35 [2] : vector<2x64x8xf32> to vector<2x64xf32>
    %142 = vector.shape_cast %141 : vector<2x64xf32> to vector<2x64x1xf32>
    %143 = tpu.reciprocal %142 {approx = true} : vector<2x64x1xf32> -> vector<2x64x1xf32>
    %144 = vector.broadcast %143 : vector<2x64x1xf32> to vector<2x64x8xf32>
    %145 = arith.mulf %140, %144 : vector<2x64x8xf32>
    %146 = arith.truncf %145 : vector<2x64x8xf32> to vector<2x64x8xbf16>
    %147 = arith.truncf %42 : vector<2x8x32xf32> to vector<2x8x32xbf16>
    "tpu.trace_start"() <{level = 10 : i32, message = "bxm,bmc->bxc"}> : () -> ()
    %cst_36 = arith.constant dense<0.000000e+00> : vector<2x64x32xf32>
    %148 = tpu.matmul %146, %147, %cst_36 {dimension_numbers = #tpu.dot_dimension_numbers<[2], [1], [1], [2], [0, 0, 0, 1, 1, 2], [0], [0]>} : vector<2x64x8xbf16>, vector<2x8x32xbf16>, vector<2x64x32xf32> -> vector<2x64x32xf32>
    "tpu.trace_stop"() : () -> ()
    %149 = vector.extract_strided_slice %148 {offsets = [0, 0, 0], sizes = [2, 8, 32], strides = [1, 1, 1]} : vector<2x64x32xf32> to vector<2x8x32xf32>
    %150 = vector.shape_cast %51 : vector<1x32xf32> to vector<1x1x32xf32>
    %151 = vector.broadcast %150 : vector<1x1x32xf32> to vector<2x8x32xf32>
    %152 = arith.mulf %149, %151 : vector<2x8x32xf32>
    %153 = vector.extract_strided_slice %148 {offsets = [0, 8, 0], sizes = [2, 8, 32], strides = [1, 1, 1]} : vector<2x64x32xf32> to vector<2x8x32xf32>
    %154 = vector.shape_cast %59 : vector<1x32xf32> to vector<1x1x32xf32>
    %155 = vector.broadcast %154 : vector<1x1x32xf32> to vector<2x8x32xf32>
    %156 = arith.mulf %153, %155 : vector<2x8x32xf32>
    %157 = arith.addf %152, %156 : vector<2x8x32xf32>
    %158 = vector.extract_strided_slice %148 {offsets = [0, 16, 0], sizes = [2, 8, 32], strides = [1, 1, 1]} : vector<2x64x32xf32> to vector<2x8x32xf32>
    %159 = vector.shape_cast %67 : vector<1x32xf32> to vector<1x1x32xf32>
    %160 = vector.broadcast %159 : vector<1x1x32xf32> to vector<2x8x32xf32>
    %161 = arith.mulf %158, %160 : vector<2x8x32xf32>
    %162 = arith.addf %157, %161 : vector<2x8x32xf32>
    %163 = vector.extract_strided_slice %148 {offsets = [0, 24, 0], sizes = [2, 8, 32], strides = [1, 1, 1]} : vector<2x64x32xf32> to vector<2x8x32xf32>
    %164 = vector.shape_cast %75 : vector<1x32xf32> to vector<1x1x32xf32>
    %165 = vector.broadcast %164 : vector<1x1x32xf32> to vector<2x8x32xf32>
    %166 = arith.mulf %163, %165 : vector<2x8x32xf32>
    %167 = arith.addf %162, %166 : vector<2x8x32xf32>
    %168 = vector.extract_strided_slice %148 {offsets = [0, 32, 0], sizes = [2, 8, 32], strides = [1, 1, 1]} : vector<2x64x32xf32> to vector<2x8x32xf32>
    %169 = vector.shape_cast %83 : vector<1x32xf32> to vector<1x1x32xf32>
    %170 = vector.broadcast %169 : vector<1x1x32xf32> to vector<2x8x32xf32>
    %171 = arith.mulf %168, %170 : vector<2x8x32xf32>
    %172 = arith.addf %167, %171 : vector<2x8x32xf32>
    %173 = vector.extract_strided_slice %148 {offsets = [0, 40, 0], sizes = [2, 8, 32], strides = [1, 1, 1]} : vector<2x64x32xf32> to vector<2x8x32xf32>
    %174 = vector.shape_cast %91 : vector<1x32xf32> to vector<1x1x32xf32>
    %175 = vector.broadcast %174 : vector<1x1x32xf32> to vector<2x8x32xf32>
    %176 = arith.mulf %173, %175 : vector<2x8x32xf32>
    %177 = arith.addf %172, %176 : vector<2x8x32xf32>
    %178 = vector.extract_strided_slice %148 {offsets = [0, 48, 0], sizes = [2, 8, 32], strides = [1, 1, 1]} : vector<2x64x32xf32> to vector<2x8x32xf32>
    %179 = vector.shape_cast %99 : vector<1x32xf32> to vector<1x1x32xf32>
    %180 = vector.broadcast %179 : vector<1x1x32xf32> to vector<2x8x32xf32>
    %181 = arith.mulf %178, %180 : vector<2x8x32xf32>
    %182 = arith.addf %177, %181 : vector<2x8x32xf32>
    %183 = vector.extract_strided_slice %148 {offsets = [0, 56, 0], sizes = [2, 8, 32], strides = [1, 1, 1]} : vector<2x64x32xf32> to vector<2x8x32xf32>
    %184 = vector.shape_cast %107 : vector<1x32xf32> to vector<1x1x32xf32>
    %185 = vector.broadcast %184 : vector<1x1x32xf32> to vector<2x8x32xf32>
    %186 = arith.mulf %183, %185 : vector<2x8x32xf32>
    %187 = arith.addf %182, %186 : vector<2x8x32xf32>
    %188 = vector.shape_cast %187 : vector<2x8x32xf32> to vector<16x32xf32>
    %189 = arith.truncf %188 : vector<16x32xf32> to vector<16x32xbf16>
    %cst_37 = arith.constant dense<0.000000e+00> : vector<16x32xf32>
    %190 = tpu.matmul %189, %11, %cst_37 {dimension_numbers = #tpu.dot_dimension_numbers<[1], [0], [0], [1], [0, 0, 1, 1], [], []>} : vector<16x32xbf16>, vector<32x32xbf16>, vector<16x32xf32> -> vector<16x32xf32>
    %191 = vector.broadcast %4 : vector<1x32xf32> to vector<16x32xf32>
    %192 = arith.addf %190, %191 : vector<16x32xf32>
    %193 = arith.addf %192, %34 : vector<16x32xf32>
    %cst_38 = arith.constant dense<0.000000e+00> : vector<16xf32>
    %194 = vector.multi_reduction <add>, %193, %cst_38 [1] : vector<16x32xf32> to vector<16xf32>
    %195 = vector.shape_cast %194 : vector<16xf32> to vector<16x1xf32>
    %cst_39 = arith.constant 3.200000e+01 : f32
    %196 = vector.broadcast %cst_39 : f32 to vector<16x1xf32>
    %197 = arith.divf %195, %196 : vector<16x1xf32>
    %198 = vector.broadcast %197 : vector<16x1xf32> to vector<16x32xf32>
    %199 = arith.subf %193, %198 : vector<16x32xf32>
    %200 = arith.mulf %199, %199 : vector<16x32xf32>
    %cst_40 = arith.constant dense<0.000000e+00> : vector<16xf32>
    %201 = vector.multi_reduction <add>, %200, %cst_40 [1] : vector<16x32xf32> to vector<16xf32>
    %202 = vector.shape_cast %201 : vector<16xf32> to vector<16x1xf32>
    %cst_41 = arith.constant 3.200000e+01 : f32
    %203 = vector.broadcast %cst_41 : f32 to vector<16x1xf32>
    %204 = arith.divf %202, %203 : vector<16x1xf32>
    %205 = vector.broadcast %197 : vector<16x1xf32> to vector<16x32xf32>
    %206 = arith.subf %193, %205 : vector<16x32xf32>
    %cst_42 = arith.constant 9.99999974E-6 : f32
    %207 = vector.broadcast %cst_42 : f32 to vector<16x1xf32>
    %208 = arith.addf %204, %207 : vector<16x1xf32>
    %209 = math.rsqrt %208 : vector<16x1xf32>
    %210 = vector.broadcast %209 : vector<16x1xf32> to vector<16x32xf32>
    %211 = arith.mulf %206, %210 : vector<16x32xf32>
    %212 = vector.broadcast %5 : vector<1x32xf32> to vector<16x32xf32>
    %213 = arith.mulf %211, %212 : vector<16x32xf32>
    %214 = vector.broadcast %6 : vector<1x32xf32> to vector<16x32xf32>
    %215 = arith.addf %213, %214 : vector<16x32xf32>
    %216 = arith.truncf %215 : vector<16x32xf32> to vector<16x32xbf16>
    %cst_43 = arith.constant dense<0.000000e+00> : vector<16x128xf32>
    %217 = tpu.matmul %216, %12, %cst_43 {dimension_numbers = #tpu.dot_dimension_numbers<[1], [0], [0], [1], [0, 0, 1, 1], [], []>} : vector<16x32xbf16>, vector<32x128xbf16>, vector<16x128xf32> -> vector<16x128xf32>
    %218 = vector.broadcast %8 : vector<1x128xf32> to vector<16x128xf32>
    %219 = arith.addf %217, %218 : vector<16x128xf32>
    %cst_44 = arith.constant 5.000000e-01 : f32
    %220 = vector.broadcast %cst_44 : f32 to vector<16x128xf32>
    %221 = arith.mulf %220, %219 : vector<16x128xf32>
    %cst_45 = arith.constant 4.471500e-02 : f32
    %222 = vector.broadcast %cst_45 : f32 to vector<16x128xf32>
    %223 = arith.mulf %222, %219 : vector<16x128xf32>
    %224 = arith.mulf %223, %219 : vector<16x128xf32>
    %225 = arith.mulf %224, %219 : vector<16x128xf32>
    %226 = arith.addf %219, %225 : vector<16x128xf32>
    %cst_46 = arith.constant 0.797884583 : f32
    %227 = vector.broadcast %cst_46 : f32 to vector<16x128xf32>
    %228 = arith.mulf %227, %226 : vector<16x128xf32>
    %229 = math.tanh %228 : vector<16x128xf32>
    %cst_47 = arith.constant 1.000000e+00 : f32
    %230 = vector.broadcast %cst_47 : f32 to vector<16x128xf32>
    %231 = arith.addf %230, %229 : vector<16x128xf32>
    %232 = arith.mulf %221, %231 : vector<16x128xf32>
    %233 = arith.truncf %232 : vector<16x128xf32> to vector<16x128xbf16>
    %c0_48 = arith.constant 0 : index
    %c0_49 = arith.constant 0 : index
    %234 = vector.load %arg3[%c0_48, %c0_49] : memref<128x32xbf16, #tpu.memory_space<vmem>>, vector<128x32xbf16>
    %cst_50 = arith.constant dense<0.000000e+00> : vector<16x32xf32>
    %235 = tpu.matmul %233, %234, %cst_50 {dimension_numbers = #tpu.dot_dimension_numbers<[1], [0], [0], [1], [0, 0, 1, 1], [], []>} : vector<16x128xbf16>, vector<128x32xbf16>, vector<16x32xf32> -> vector<16x32xf32>
    %236 = vector.broadcast %7 : vector<1x32xf32> to vector<16x32xf32>
    %237 = arith.addf %235, %236 : vector<16x32xf32>
    %238 = arith.addf %237, %215 : vector<16x32xf32>
    %c0_51 = arith.constant 0 : index
    %c0_52 = arith.constant 0 : index
    %239 = vector.load %arg4[%c0_51, %c0_52] : memref<16x32xf32, #tpu.memory_space<vmem>>, vector<16x32xf32>
    tpu.vector_store %arg4[%c0_51, %c0_52], %238 {strides = array<i32>} : memref<16x32xf32, #tpu.memory_space<vmem>>, vector<16x32xf32>,
    return
  }
}

</mosaic_0001>

<llo_original>
// kernel: transformer_encoder_block.1
$region0: #{transformer_encoder_block.1}
  #allocation0 [shape = 'u32[]', space=smem, size = 0x4, offset = 0x4, fixed_abs, tag = 'smem constant byte address 0x4 - core index']
  #allocation1 [shape = 'u32[72,128]{1,0:T(1,128)}', space=vmem, size = 0x9000, scoped, tag = 'internal scratch']
  %s0 = inlined_call_operand.hbm [shape: f32[16,32], index: 0, kind: input, shape index: {}]
  %s1 = inlined_call_operand.hbm [shape: f32[8,128], index: 1, kind: input, shape index: {}]
  %s2 = inlined_call_operand.vmem [shape: bf16[32,640], index: 2, kind: input, shape index: {}]
  %s3 = inlined_call_operand.vmem [shape: bf16[128,32], index: 3, kind: input, shape index: {}]
  %s4 = inlined_call_operand.hbm [shape: f32[16,32], index: 4, kind: output, shape index: {}]
  %s5 = sld [smem:[#allocation0]]
  $region34: #{transformer_encoder_block.1} parent=0
    _
  %s7 = ssub.s32 1, %s5
  %s8 = scalar_select 0, %s7, %s5
  $region1: #{transformer_encoder_block.1} parent=0
    #allocation2 [shape = 'u8[8192]{0}', space=vmem, size = 0x2000, scoped, tag = 'input window, operand 0, single buffered']
    #allocation3 [shape = 's32[1]{0}', space=sflag, size = 0x4, scoped, tag = 'scoped memory for transformer_encoder_block.1']
    #allocation4 [shape = 's32[1]{0}', space=sflag, size = 0x4, scoped, tag = 'scoped memory for transformer_encoder_block.1']
    #allocation5 [shape = 'u8[4096]{0}', space=vmem, size = 0x1000, scoped, tag = 'input window, operand 1, single buffered']
    #allocation6 [shape = 's32[1]{0}', space=sflag, size = 0x4, scoped, tag = 'scoped memory for transformer_encoder_block.1']
    #allocation7 [shape = 'u8[8192]{0}', space=vmem, size = 0x2000, scoped, tag = 'output window, operand 0, single buffered']
    %9 = vsyncpa [#allocation3], 0
    %10 = vsyncpa [#allocation6], 0
    %11 = vsyncpa [#allocation4], 0
    // Predicated region
    $region2: #{transformer_encoder_block.1} parent=1 // pred_check
      _
    $region3: #{transformer_encoder_block.1} parent=1 // pred_check_branch
      %13 = sbr.rel (0) target = $region5
    $region4: #{transformer_encoder_block.1} parent=1 // pred_region
      %15 = vsyncadd [#allocation3], 0
      %s16 = sshll.u32 %s0, 4
      %s17 = int_to_ptr.hbm [resolvable:$true] %s16
      %s18 = sshll.u32 [#allocation2], 4
      %s19 = int_to_ptr.vmem [resolvable:$true] %s18
      %24 = dma.hbm_to_vmem [thread:$0]  %s17, 256, %s19, [#allocation3], 128, 128, 8
    $region5: #{transformer_encoder_block.1} parent=1 // pred_fallthru
      _
    // Predicated region
    $region6: #{transformer_encoder_block.1} parent=1 // pred_check
      _
    $region7: #{transformer_encoder_block.1} parent=1 // pred_check_branch
      %26 = sbr.rel (0) target = $region9
    $region8: #{transformer_encoder_block.1} parent=1 // pred_region
      %28 = vsyncadd [#allocation6], 0
      %s30 = sshll.u32 %s1, 4
      %s31 = int_to_ptr.hbm [resolvable:$true] %s30
      %s32 = sshll.u32 [#allocation5], 4
      %s33 = int_to_ptr.vmem [resolvable:$true] %s32
      %35 = dma.hbm_to_vmem [thread:$0]  %s31, 128, %s33, [#allocation6]
    $region9: #{transformer_encoder_block.1} parent=1 // pred_fallthru
      _
    // Predicated region
    $region10: #{transformer_encoder_block.1} parent=1 // pred_check
      _
    $region11: #{transformer_encoder_block.1} parent=1 // pred_check_branch
      %37 = sbr.rel (0) target = $region13
    $region12: #{transformer_encoder_block.1} parent=1 // pred_region
      _
    $region13: #{transformer_encoder_block.1} parent=1 // pred_fallthru
      _
    // Predicated region
    $region14: #{transformer_encoder_block.1} parent=1 // pred_check
      _
    $region15: #{transformer_encoder_block.1} parent=1 // pred_check_branch
      %39 = sbr.rel (0) target = $region17
    $region16: #{transformer_encoder_block.1} parent=1 // pred_region
      _
    $region17: #{transformer_encoder_block.1} parent=1 // pred_fallthru
      _
    // Predicated region
    $region18: #{transformer_encoder_block.1} parent=1 // pred_check
      _
    $region19: #{transformer_encoder_block.1} parent=1 // pred_check_branch
      %41 = sbr.rel (0) target = $region21
    $region20: #{transformer_encoder_block.1} parent=1 // pred_region
      %43 = dma.done [#allocation3], 256
    $region21: #{transformer_encoder_block.1} parent=1 // pred_fallthru
      _
    // Predicated region
    $region22: #{transformer_encoder_block.1} parent=1 // pred_check
      _
    $region23: #{transformer_encoder_block.1} parent=1 // pred_check_branch
      %45 = sbr.rel (0) target = $region25
    $region24: #{transformer_encoder_block.1} parent=1 // pred_region
      %47 = dma.done [#allocation6], 128
    $region25: #{transformer_encoder_block.1} parent=1 // pred_fallthru
      _
    %v49 = vld [vmem:[#allocation2] sm:$0xff]
    %v50 = vld [vmem:[#allocation2 + $0x8] sm:$0xff]
    %v51 = vld [vmem:[#allocation5] sm:$0xff]
    %v52 = vld [vmem:[%s2] sm:$0xff]
    %v53 = vld [vmem:[%s2 + $0x8] sm:$0xff]
    %v54 = vld [vmem:[%s2 + $0x10] sm:$0xf]
    %v55 = vld [vmem:[%s2 + $0x14] sm:$0xff]
    %v56 = vld [vmem:[%s2 + $0x1c] sm:$0xff]
    %v57 = vld [vmem:[%s2 + $0x24] sm:$0xf]
    %v58 = vld [vmem:[%s2 + $0x28] sm:$0xff]
    %v59 = vld [vmem:[%s2 + $0x30] sm:$0xff]
    %v60 = vld [vmem:[%s2 + $0x38] sm:$0xf]
    %v61 = vld [vmem:[%s2 + $0x3c] sm:$0xff]
    %v62 = vld [vmem:[%s2 + $0x44] sm:$0xff]
    %v63 = vld [vmem:[%s2 + $0x4c] sm:$0xf]
    %vm64 = vcmask 261120
    %v65 = vsel %vm64, %v49, 0.0
    %66 = vadd.xlane.f32.xlu0 %v65
    %v67 = vpop.xlane.xlu0 %66
    %v68 = vsel %vm64, %v50, 0.0
    %69 = vadd.xlane.f32.xlu0 %v68
    %v70 = vpop.xlane.xlu0 %69
    %v71 = vrcp.pop 32.0
    %v72 = vmul.f32 32.0, %v71
    %v73 = vsub.f32 1.0, %v72
    %v74 = vmul.f32 %v71, %v73
    %v75 = vadd.f32 %v71, %v74
    %vm76 = vweird.f32 %v71
    %v77 = vsel %vm76, %v71, %v75
    %v78 = vmul.f32 %v67, %v77
    %v79 = vmul.f32 %v70, %v77
    %v80 = vsub.f32 %v49, %v78
    %v81 = vsub.f32 %v50, %v79
    %v82 = vmul.f32 %v80, %v80
    %v83 = vmul.f32 %v81, %v81
    %v84 = vsel %vm64, %v82, 0.0
    %85 = vadd.xlane.f32.xlu0 %v84
    %v86 = vpop.xlane.xlu0 %85
    %v87 = vsel %vm64, %v83, 0.0
    %88 = vadd.xlane.f32.xlu0 %v87
    %v89 = vpop.xlane.xlu0 %88
    %v90 = vmul.f32 %v86, %v77
    %v91 = vmul.f32 %v89, %v77
    %v92 = vadd.f32 %v90, 1e-05
    %v93 = vadd.f32 %v91, 1e-05
    %v94 = vrsqrt.pop %v92
    %v95 = vmul.f32 %v94, %v92
    %v96 = vmul.f32 %v95, %v94
    %v97 = vmul.f32 0.5, %v96
    %v98 = vsub.f32 1.5, %v97
    %v99 = vmul.f32 %v94, %v98
    %vm100 = vweird.f32 %v92
    %vm101 = vweird.f32 %v94
    %vm102 = vmor %vm100, %vm101
    %v103 = vsel %vm102, %v94, %v99
    %v104 = vrsqrt.pop %v93
    %v105 = vmul.f32 %v104, %v93
    %v106 = vmul.f32 %v105, %v104
    %v107 = vmul.f32 0.5, %v106
    %v108 = vsub.f32 1.5, %v107
    %v109 = vmul.f32 %v104, %v108
    %vm110 = vweird.f32 %v93
    %vm111 = vweird.f32 %v104
    %vm112 = vmor %vm110, %vm111
    %v113 = vsel %vm112, %v104, %v109
    %v114 = vmul.f32 %v80, %v103
    %v115 = vmul.f32 %v81, %v113
    %v116 = vperm.slane %v51, 0
    %v117 = vmul.f32 %v114, %v116
    %v118 = vmul.f32 %v115, %v116
    %v119 = vperm.slane %v51, 1
    %v120 = vadd.f32 %v117, %v119
    %v121 = vadd.f32 %v118, %v119
    %v122 = vpack.c.bf16 %v121, %v120
    %v131 = vunpack.c.l.b16 %v52
    %v132 = vunpack.c.h.b16 %v52
    %v133 = vunpack.c.l.b16 %v53
    %v134 = vunpack.c.l.b16 %v55
    %v135 = vunpack.c.h.b16 %v55
    %v136 = vunpack.c.l.b16 %v56
    %v137 = vunpack.c.l.b16 %v58
    %v138 = vunpack.c.h.b16 %v58
    %v139 = vunpack.c.l.b16 %v59
    %v140 = vunpack.c.l.b16 %v61
    %v141 = vunpack.c.h.b16 %v61
    %v142 = vunpack.c.l.b16 %v62
    %v143 = vpack.c.b16 %v134, %v131
    %v144 = vpack.c.b16 %v135, %v132
    %v145 = vpack.c.b16 %v136, %v133
    %v146 = vpack.c.b16 %v140, %v137
    %v147 = vpack.c.b16 %v141, %v138
    %v148 = vpack.c.b16 %v142, %v139
    %v156 = vsel %vm64, %v122, 0
    %158 = vmatpush.bf16.msra.mxu0 0
    %159 = vmatpush.bf16.msra.mxu0 0
    %160 = vmatpush.bf16.msra.mxu0 0
    %161 = vmatpush.bf16.msra.mxu0 0
    %162 = vmatpush.bf16.msra.mxu0 0
    %163 = vmatpush.bf16.msra.mxu0 0
    %164 = vmatpush.bf16.msra.mxu0 %v146
    %165 = vmatpush.bf16.msra.mxu0 %v143
    %166 = vmatmul.bf16.gmra.mxu0 %v156
    %v167 = vpop.f32.mrf.mxu0
    %v168 = vadd.f32 0.0, %v167
    %v169 = vpop.f32.mrf.mxu0
    %v170 = vadd.f32 0.0, %v169
    %171 = vdwg.mxu0
    %172 = vmatpush.bf16.msra.mxu0 0
    %173 = vmatpush.bf16.msra.mxu0 0
    %174 = vmatpush.bf16.msra.mxu0 0
    %175 = vmatpush.bf16.msra.mxu0 0
    %176 = vmatpush.bf16.msra.mxu0 0
    %177 = vmatpush.bf16.msra.mxu0 0
    %178 = vmatpush.bf16.msra.mxu0 %v147
    %179 = vmatpush.bf16.msra.mxu0 %v144
    %180 = vmatmul.bf16.gmra.mxu0 %v156
    %v181 = vpop.f32.mrf.mxu0
    %v182 = vadd.f32 0.0, %v181
    %v183 = vpop.f32.mrf.mxu0
    %v184 = vadd.f32 0.0, %v183
    %185 = vdwg.mxu0
    %186 = vmatpush.bf16.msra.mxu0 0
    %187 = vmatpush.bf16.msra.mxu0 0
    %188 = vmatpush.bf16.msra.mxu0 0
    %189 = vmatpush.bf16.msra.mxu0 0
    %190 = vmatpush.bf16.msra.mxu0 0
    %191 = vmatpush.bf16.msra.mxu0 0
    %192 = vmatpush.bf16.msra.mxu0 %v148
    %193 = vmatpush.bf16.msra.mxu0 %v145
    %194 = vmatmul.bf16.gmra.mxu0 %v156
    %v195 = vpop.f32.mrf.mxu0
    %v196 = vadd.f32 0.0, %v195
    %v197 = vpop.f32.mrf.mxu0
    %v198 = vadd.f32 0.0, %v197
    %199 = vdwg.mxu0
    %v200 = vlaneseq
    %v201 = vand.u32 %v200, 127
    %vm202 = vcmp.ge.s32.totalorder %v201, 0
    %vm203 = vcmp.lt.s32.totalorder %v201, 4
    %vm204 = vmand %vm202, %vm203
    %v205 = vsel %vm204, 1.0, 0.0
    %vm206 = vcmp.ge.s32.totalorder %v201, 4
    %vm207 = vcmp.lt.s32.totalorder %v201, 8
    %vm208 = vmand %vm206, %vm207
    %v209 = vsel %vm208, 1.0, 0.0
    %vm210 = vcmp.ge.s32.totalorder %v201, 8
    %vm211 = vcmp.lt.s32.totalorder %v201, 12
    %vm212 = vmand %vm210, %vm211
    %v213 = vsel %vm212, 1.0, 0.0
    %vm214 = vcmp.ge.s32.totalorder %v201, 12
    %vm215 = vcmp.lt.s32.totalorder %v201, 16
    %vm216 = vmand %vm214, %vm215
    %v217 = vsel %vm216, 1.0, 0.0
    %vm218 = vcmp.ge.s32.totalorder %v201, 16
    %vm219 = vcmp.lt.s32.totalorder %v201, 20
    %vm220 = vmand %vm218, %vm219
    %v221 = vsel %vm220, 1.0, 0.0
    %vm222 = vcmp.ge.s32.totalorder %v201, 20
    %vm223 = vcmp.lt.s32.totalorder %v201, 24
    %vm224 = vmand %vm222, %vm223
    %v225 = vsel %vm224, 1.0, 0.0
    %vm226 = vcmp.ge.s32.totalorder %v201, 24
    %vm227 = vcmp.lt.s32.totalorder %v201, 28
    %vm228 = vmand %vm226, %vm227
    %v229 = vsel %vm228, 1.0, 0.0
    %vm230 = vcmp.ge.s32.totalorder %v201, 28
    %vm231 = vcmp.lt.s32.totalorder %v201, 32
    %vm232 = vmand %vm230, %vm231
    %v233 = vsel %vm232, 1.0, 0.0
    %v234 = vmul.f32 %v168, %v205
    %v235 = vmul.f32 %v170, %v205
    %v236 = vmul.f32 %v168, %v209
    %v237 = vmul.f32 %v170, %v209
    %v238 = vmul.f32 %v168, %v213
    %v239 = vmul.f32 %v170, %v213
    %v240 = vmul.f32 %v168, %v217
    %v241 = vmul.f32 %v170, %v217
    %v242 = vmul.f32 %v168, %v221
    %v243 = vmul.f32 %v170, %v221
    %v244 = vmul.f32 %v168, %v225
    %v245 = vmul.f32 %v170, %v225
    %v246 = vmul.f32 %v168, %v229
    %v247 = vmul.f32 %v170, %v229
    %v248 = vmul.f32 %v168, %v233
    %v249 = vmul.f32 %v170, %v233
    %v250 = vpack.c.bf16 %v234, %v234
    %v251 = vpack.c.bf16 %v236, %v236
    %v252 = vpack.c.bf16 %v238, %v238
    %v253 = vpack.c.bf16 %v240, %v240
    %v254 = vpack.c.bf16 %v242, %v242
    %v255 = vpack.c.bf16 %v244, %v244
    %v256 = vpack.c.bf16 %v246, %v246
    %v257 = vpack.c.bf16 %v248, %v248
    %v258 = vpack.c.bf16 %v235, %v235
    %v259 = vpack.c.bf16 %v237, %v237
    %v260 = vpack.c.bf16 %v239, %v239
    %v261 = vpack.c.bf16 %v241, %v241
    %v262 = vpack.c.bf16 %v243, %v243
    %v263 = vpack.c.bf16 %v245, %v245
    %v264 = vpack.c.bf16 %v247, %v247
    %v265 = vpack.c.bf16 %v249, %v249
    %v266 = vpack.c.bf16 %v182, %v182
    %v267 = vpack.c.bf16 %v184, %v184
    %v276 = vunpack.c.l.b16 %v250
    %v277 = vunpack.c.l.b16 %v251
    %v278 = vunpack.c.l.b16 %v252
    %v279 = vunpack.c.l.b16 %v253
    %v280 = vunpack.c.l.b16 %v254
    %v281 = vunpack.c.l.b16 %v255
    %v282 = vunpack.c.l.b16 %v256
    %v283 = vunpack.c.l.b16 %v257
    %v284 = vpack.c.b16 %v277, %v276
    %v285 = vpack.c.b16 %v279, %v278
    %v286 = vpack.c.b16 %v281, %v280
    %v287 = vpack.c.b16 %v283, %v282
    %v289 = vsel %vm64, %v284, 0
    %v292 = vsel %vm64, %v285, 0
    %v295 = vsel %vm64, %v286, 0
    %v298 = vsel %vm64, %v287, 0
    %v301 = vsel %vm64, %v266, 0
    %303 = vmatpush.bf16.xpose.msra.mxu0 0
    %304 = vmatpush.bf16.xpose.msra.mxu0 0
    %305 = vmatpush.bf16.xpose.msra.mxu0 0
    %306 = vmatpush.bf16.xpose.msra.mxu0 0
    %307 = vmatpush.bf16.xpose.msra.mxu0 0
    %308 = vmatpush.bf16.xpose.msra.mxu0 0
    %309 = vmatpush.bf16.xpose.msra.mxu0 0
    %310 = vmatpush.bf16.xpose.msra.mxu0 %v301
    %311 = vmatmul.bf16.gmra.mxu0 %v289
    %v312 = vpop.f32.mrf.mxu0
    %v313 = vadd.f32 0.0, %v312
    %v314 = vpop.f32.mrf.mxu0
    %v315 = vadd.f32 0.0, %v314
    %316 = vmatmul.bf16.gmra.mxu0 %v292
    %v317 = vpop.f32.mrf.mxu0
    %v318 = vadd.f32 0.0, %v317
    %v319 = vpop.f32.mrf.mxu0
    %v320 = vadd.f32 0.0, %v319
    %321 = vmatmul.bf16.gmra.mxu0 %v295
    %v322 = vpop.f32.mrf.mxu0
    %v323 = vadd.f32 0.0, %v322
    %v324 = vpop.f32.mrf.mxu0
    %v325 = vadd.f32 0.0, %v324
    %326 = vmatmul.bf16.gmra.mxu0 %v298
    %v327 = vpop.f32.mrf.mxu0
    %v328 = vadd.f32 0.0, %v327
    %v329 = vpop.f32.mrf.mxu0
    %v330 = vadd.f32 0.0, %v329
    %331 = vdwg.mxu0
    %v340 = vunpack.c.l.b16 %v258
    %v341 = vunpack.c.l.b16 %v259
    %v342 = vunpack.c.l.b16 %v260
    %v343 = vunpack.c.l.b16 %v261
    %v344 = vunpack.c.l.b16 %v262
    %v345 = vunpack.c.l.b16 %v263
    %v346 = vunpack.c.l.b16 %v264
    %v347 = vunpack.c.l.b16 %v265
    %v348 = vpack.c.b16 %v341, %v340
    %v349 = vpack.c.b16 %v343, %v342
    %v350 = vpack.c.b16 %v345, %v344
    %v351 = vpack.c.b16 %v347, %v346
    %v353 = vsel %vm64, %v348, 0
    %v356 = vsel %vm64, %v349, 0
    %v359 = vsel %vm64, %v350, 0
    %v362 = vsel %vm64, %v351, 0
    %v365 = vsel %vm64, %v267, 0
    %367 = vmatpush.bf16.xpose.msra.mxu0 0
    %368 = vmatpush.bf16.xpose.msra.mxu0 0
    %369 = vmatpush.bf16.xpose.msra.mxu0 0
    %370 = vmatpush.bf16.xpose.msra.mxu0 0
    %371 = vmatpush.bf16.xpose.msra.mxu0 0
    %372 = vmatpush.bf16.xpose.msra.mxu0 0
    %373 = vmatpush.bf16.xpose.msra.mxu0 0
    %374 = vmatpush.bf16.xpose.msra.mxu0 %v365
    %375 = vmatmul.bf16.gmra.mxu0 %v353
    %v376 = vpop.f32.mrf.mxu0
    %v377 = vadd.f32 0.0, %v376
    %v378 = vpop.f32.mrf.mxu0
    %v379 = vadd.f32 0.0, %v378
    %380 = vmatmul.bf16.gmra.mxu0 %v356
    %v381 = vpop.f32.mrf.mxu0
    %v382 = vadd.f32 0.0, %v381
    %v383 = vpop.f32.mrf.mxu0
    %v384 = vadd.f32 0.0, %v383
    %385 = vmatmul.bf16.gmra.mxu0 %v359
    %v386 = vpop.f32.mrf.mxu0
    %v387 = vadd.f32 0.0, %v386
    %v388 = vpop.f32.mrf.mxu0
    %v389 = vadd.f32 0.0, %v388
    %390 = vmatmul.bf16.gmra.mxu0 %v362
    %v391 = vpop.f32.mrf.mxu0
    %v392 = vadd.f32 0.0, %v391
    %v393 = vpop.f32.mrf.mxu0
    %v394 = vadd.f32 0.0, %v393
    %395 = vdwg.mxu0
    %vm396 = vcmask 64512
    %v397 = vsel %vm396, %v313, -inf
    %398 = vmax.xlane.f32.xlu0 %v397
    %v399 = vpop.xlane.xlu0 %398
    %v400 = vsel %vm396, %v315, -inf
    %401 = vmax.xlane.f32.xlu0 %v400
    %v402 = vpop.xlane.xlu0 %401
    %v403 = vsel %vm396, %v318, -inf
    %404 = vmax.xlane.f32.xlu0 %v403
    %v405 = vpop.xlane.xlu0 %404
    %v406 = vsel %vm396, %v320, -inf
    %407 = vmax.xlane.f32.xlu0 %v406
    %v408 = vpop.xlane.xlu0 %407
    %v409 = vsel %vm396, %v323, -inf
    %410 = vmax.xlane.f32.xlu0 %v409
    %v411 = vpop.xlane.xlu0 %410
    %v412 = vsel %vm396, %v325, -inf
    %413 = vmax.xlane.f32.xlu0 %v412
    %v414 = vpop.xlane.xlu0 %413
    %v415 = vsel %vm396, %v328, -inf
    %416 = vmax.xlane.f32.xlu0 %v415
    %v417 = vpop.xlane.xlu0 %416
    %v418 = vsel %vm396, %v330, -inf
    %419 = vmax.xlane.f32.xlu0 %v418
    %v420 = vpop.xlane.xlu0 %419
    %v421 = vsel %vm396, %v377, -inf
    %422 = vmax.xlane.f32.xlu0 %v421
    %v423 = vpop.xlane.xlu0 %422
    %v424 = vsel %vm396, %v379, -inf
    %425 = vmax.xlane.f32.xlu0 %v424
    %v426 = vpop.xlane.xlu0 %425
    %v427 = vsel %vm396, %v382, -inf
    %428 = vmax.xlane.f32.xlu0 %v427
    %v429 = vpop.xlane.xlu0 %428
    %v430 = vsel %vm396, %v384, -inf
    %431 = vmax.xlane.f32.xlu0 %v430
    %v432 = vpop.xlane.xlu0 %431
    %v433 = vsel %vm396, %v387, -inf
    %434 = vmax.xlane.f32.xlu0 %v433
    %v435 = vpop.xlane.xlu0 %434
    %v436 = vsel %vm396, %v389, -inf
    %437 = vmax.xlane.f32.xlu0 %v436
    %v438 = vpop.xlane.xlu0 %437
    %v439 = vsel %vm396, %v392, -inf
    %440 = vmax.xlane.f32.xlu0 %v439
    %v441 = vpop.xlane.xlu0 %440
    %v442 = vsel %vm396, %v394, -inf
    %443 = vmax.xlane.f32.xlu0 %v442
    %v444 = vpop.xlane.xlu0 %443
    %v445 = vsub.f32 %v313, %v399
    %v446 = vsub.f32 %v315, %v402
    %v447 = vsub.f32 %v318, %v405
    %v448 = vsub.f32 %v320, %v408
    %v449 = vsub.f32 %v323, %v411
    %v450 = vsub.f32 %v325, %v414
    %v451 = vsub.f32 %v328, %v417
    %v452 = vsub.f32 %v330, %v420
    %v453 = vsub.f32 %v377, %v423
    %v454 = vsub.f32 %v379, %v426
    %v455 = vsub.f32 %v382, %v429
    %v456 = vsub.f32 %v384, %v432
    %v457 = vsub.f32 %v387, %v435
    %v458 = vsub.f32 %v389, %v438
    %v459 = vsub.f32 %v392, %v441
    %v460 = vsub.f32 %v394, %v444
    %v461 = vmul.f32 %v445, 1.442695
    %v462 = vpow.pop %v461
    %v463 = vmul.f32 %v446, 1.442695
    %v464 = vpow.pop %v463
    %v465 = vmul.f32 %v447, 1.442695
    %v466 = vpow.pop %v465
    %v467 = vmul.f32 %v448, 1.442695
    %v468 = vpow.pop %v467
    %v469 = vmul.f32 %v449, 1.442695
    %v470 = vpow.pop %v469
    %v471 = vmul.f32 %v450, 1.442695
    %v472 = vpow.pop %v471
    %v473 = vmul.f32 %v451, 1.442695
    %v474 = vpow.pop %v473
    %v475 = vmul.f32 %v452, 1.442695
    %v476 = vpow.pop %v475
    %v477 = vmul.f32 %v453, 1.442695
    %v478 = vpow.pop %v477
    %v479 = vmul.f32 %v454, 1.442695
    %v480 = vpow.pop %v479
    %v481 = vmul.f32 %v455, 1.442695
    %v482 = vpow.pop %v481
    %v483 = vmul.f32 %v456, 1.442695
    %v484 = vpow.pop %v483
    %v485 = vmul.f32 %v457, 1.442695
    %v486 = vpow.pop %v485
    %v487 = vmul.f32 %v458, 1.442695
    %v488 = vpow.pop %v487
    %v489 = vmul.f32 %v459, 1.442695
    %v490 = vpow.pop %v489
    %v491 = vmul.f32 %v460, 1.442695
    %v492 = vpow.pop %v491
    %v493 = vsel %vm396, %v462, 0.0
    %494 = vadd.xlane.f32.xlu0 %v493
    %v495 = vpop.xlane.xlu0 %494
    %v496 = vsel %vm396, %v464, 0.0
    %497 = vadd.xlane.f32.xlu0 %v496
    %v498 = vpop.xlane.xlu0 %497
    %v499 = vsel %vm396, %v466, 0.0
    %500 = vadd.xlane.f32.xlu0 %v499
    %v501 = vpop.xlane.xlu0 %500
    %v502 = vsel %vm396, %v468, 0.0
    %503 = vadd.xlane.f32.xlu0 %v502
    %v504 = vpop.xlane.xlu0 %503
    %v505 = vsel %vm396, %v470, 0.0
    %506 = vadd.xlane.f32.xlu0 %v505
    %v507 = vpop.xlane.xlu0 %506
    %v508 = vsel %vm396, %v472, 0.0
    %509 = vadd.xlane.f32.xlu0 %v508
    %v510 = vpop.xlane.xlu0 %509
    %v511 = vsel %vm396, %v474, 0.0
    %512 = vadd.xlane.f32.xlu0 %v511
    %v513 = vpop.xlane.xlu0 %512
    %v514 = vsel %vm396, %v476, 0.0
    %515 = vadd.xlane.f32.xlu0 %v514
    %v516 = vpop.xlane.xlu0 %515
    %v517 = vsel %vm396, %v478, 0.0
    %518 = vadd.xlane.f32.xlu0 %v517
    %v519 = vpop.xlane.xlu0 %518
    %v520 = vsel %vm396, %v480, 0.0
    %521 = vadd.xlane.f32.xlu0 %v520
    %v522 = vpop.xlane.xlu0 %521
    %v523 = vsel %vm396, %v482, 0.0
    %524 = vadd.xlane.f32.xlu0 %v523
    %v525 = vpop.xlane.xlu0 %524
    %v526 = vsel %vm396, %v484, 0.0
    %527 = vadd.xlane.f32.xlu0 %v526
    %v528 = vpop.xlane.xlu0 %527
    %v529 = vsel %vm396, %v486, 0.0
    %530 = vadd.xlane.f32.xlu0 %v529
    %v531 = vpop.xlane.xlu0 %530
    %v532 = vsel %vm396, %v488, 0.0
    %533 = vadd.xlane.f32.xlu0 %v532
    %v534 = vpop.xlane.xlu0 %533
    %v535 = vsel %vm396, %v490, 0.0
    %536 = vadd.xlane.f32.xlu0 %v535
    %v537 = vpop.xlane.xlu0 %536
    %v538 = vsel %vm396, %v492, 0.0
    %539 = vadd.xlane.f32.xlu0 %v538
    %v540 = vpop.xlane.xlu0 %539
    %v541 = vrcp.pop %v495
    %v542 = vrcp.pop %v498
    %v543 = vrcp.pop %v501
    %v544 = vrcp.pop %v504
    %v545 = vrcp.pop %v507
    %v546 = vrcp.pop %v510
    %v547 = vrcp.pop %v513
    %v548 = vrcp.pop %v516
    %v549 = vrcp.pop %v519
    %v550 = vrcp.pop %v522
    %v551 = vrcp.pop %v525
    %v552 = vrcp.pop %v528
    %v553 = vrcp.pop %v531
    %v554 = vrcp.pop %v534
    %v555 = vrcp.pop %v537
    %v556 = vrcp.pop %v540
    %v557 = vmul.f32 %v462, %v541
    %v558 = vmul.f32 %v464, %v542
    %v559 = vmul.f32 %v466, %v543
    %v560 = vmul.f32 %v468, %v544
    %v561 = vmul.f32 %v470, %v545
    %v562 = vmul.f32 %v472, %v546
    %v563 = vmul.f32 %v474, %v547
    %v564 = vmul.f32 %v476, %v548
    %v565 = vmul.f32 %v478, %v549
    %v566 = vmul.f32 %v480, %v550
    %v567 = vmul.f32 %v482, %v551
    %v568 = vmul.f32 %v484, %v552
    %v569 = vmul.f32 %v486, %v553
    %v570 = vmul.f32 %v488, %v554
    %v571 = vmul.f32 %v490, %v555
    %v572 = vmul.f32 %v492, %v556
    %v573 = vpack.c.bf16 %v557, %v557
    %v574 = vpack.c.bf16 %v558, %v558
    %v575 = vpack.c.bf16 %v559, %v559
    %v576 = vpack.c.bf16 %v560, %v560
    %v577 = vpack.c.bf16 %v561, %v561
    %v578 = vpack.c.bf16 %v562, %v562
    %v579 = vpack.c.bf16 %v563, %v563
    %v580 = vpack.c.bf16 %v564, %v564
    %v581 = vpack.c.bf16 %v565, %v565
    %v582 = vpack.c.bf16 %v566, %v566
    %v583 = vpack.c.bf16 %v567, %v567
    %v584 = vpack.c.bf16 %v568, %v568
    %v585 = vpack.c.bf16 %v569, %v569
    %v586 = vpack.c.bf16 %v570, %v570
    %v587 = vpack.c.bf16 %v571, %v571
    %v588 = vpack.c.bf16 %v572, %v572
    %v589 = vpack.c.bf16 %v196, %v196
    %v590 = vpack.c.bf16 %v198, %v198
    %v599 = vunpack.c.l.b16 %v573
    %v600 = vunpack.c.l.b16 %v574
    %v601 = vunpack.c.l.b16 %v575
    %v602 = vunpack.c.l.b16 %v576
    %v603 = vunpack.c.l.b16 %v577
    %v604 = vunpack.c.l.b16 %v578
    %v605 = vunpack.c.l.b16 %v579
    %v606 = vunpack.c.l.b16 %v580
    %v607 = vpack.c.b16 %v600, %v599
    %v608 = vpack.c.b16 %v602, %v601
    %v609 = vpack.c.b16 %v604, %v603
    %v610 = vpack.c.b16 %v606, %v605
    %v612 = vsel %vm396, %v607, 0
    %v615 = vsel %vm396, %v608, 0
    %v618 = vsel %vm396, %v609, 0
    %v621 = vsel %vm396, %v610, 0
    %vm623 = vcmask 1043456
    %v625 = vsel %vm623, %v589, 0
    %627 = vmatpush.bf16.msra.mxu0 0
    %628 = vmatpush.bf16.msra.mxu0 0
    %629 = vmatpush.bf16.msra.mxu0 0
    %630 = vmatpush.bf16.msra.mxu0 0
    %631 = vmatpush.bf16.msra.mxu0 0
    %632 = vmatpush.bf16.msra.mxu0 0
    %633 = vmatpush.bf16.msra.mxu0 0
    %634 = vmatpush.bf16.msra.mxu0 %v625
    %635 = vmatmul.bf16.gmra.mxu0 %v612
    %v636 = vpop.f32.mrf.mxu0
    %v637 = vadd.f32 0.0, %v636
    %v638 = vpop.f32.mrf.mxu0
    %v639 = vadd.f32 0.0, %v638
    %640 = vmatmul.bf16.gmra.mxu0 %v615
    %v641 = vpop.f32.mrf.mxu0
    %v642 = vadd.f32 0.0, %v641
    %v643 = vpop.f32.mrf.mxu0
    %v644 = vadd.f32 0.0, %v643
    %645 = vmatmul.bf16.gmra.mxu0 %v618
    %v646 = vpop.f32.mrf.mxu0
    %v647 = vadd.f32 0.0, %v646
    %v648 = vpop.f32.mrf.mxu0
    %v649 = vadd.f32 0.0, %v648
    %650 = vmatmul.bf16.gmra.mxu0 %v621
    %v651 = vpop.f32.mrf.mxu0
    %v652 = vadd.f32 0.0, %v651
    %v653 = vpop.f32.mrf.mxu0
    %v654 = vadd.f32 0.0, %v653
    %655 = vdwg.mxu0
    %v664 = vunpack.c.l.b16 %v581
    %v665 = vunpack.c.l.b16 %v582
    %v666 = vunpack.c.l.b16 %v583
    %v667 = vunpack.c.l.b16 %v584
    %v668 = vunpack.c.l.b16 %v585
    %v669 = vunpack.c.l.b16 %v586
    %v670 = vunpack.c.l.b16 %v587
    %v671 = vunpack.c.l.b16 %v588
    %v672 = vpack.c.b16 %v665, %v664
    %v673 = vpack.c.b16 %v667, %v666
    %v674 = vpack.c.b16 %v669, %v668
    %v675 = vpack.c.b16 %v671, %v670
    %v677 = vsel %vm396, %v672, 0
    %v680 = vsel %vm396, %v673, 0
    %v683 = vsel %vm396, %v674, 0
    %v686 = vsel %vm396, %v675, 0
    %v689 = vsel %vm623, %v590, 0
    %691 = vmatpush.bf16.msra.mxu0 0
    %692 = vmatpush.bf16.msra.mxu0 0
    %693 = vmatpush.bf16.msra.mxu0 0
    %694 = vmatpush.bf16.msra.mxu0 0
    %695 = vmatpush.bf16.msra.mxu0 0
    %696 = vmatpush.bf16.msra.mxu0 0
    %697 = vmatpush.bf16.msra.mxu0 0
    %698 = vmatpush.bf16.msra.mxu0 %v689
    %699 = vmatmul.bf16.gmra.mxu0 %v677
    %v700 = vpop.f32.mrf.mxu0
    %v701 = vadd.f32 0.0, %v700
    %v702 = vpop.f32.mrf.mxu0
    %v703 = vadd.f32 0.0, %v702
    %704 = vmatmul.bf16.gmra.mxu0 %v680
    %v705 = vpop.f32.mrf.mxu0
    %v706 = vadd.f32 0.0, %v705
    %v707 = vpop.f32.mrf.mxu0
    %v708 = vadd.f32 0.0, %v707
    %709 = vmatmul.bf16.gmra.mxu0 %v683
    %v710 = vpop.f32.mrf.mxu0
    %v711 = vadd.f32 0.0, %v710
    %v712 = vpop.f32.mrf.mxu0
    %v713 = vadd.f32 0.0, %v712
    %714 = vmatmul.bf16.gmra.mxu0 %v686
    %v715 = vpop.f32.mrf.mxu0
    %v716 = vadd.f32 0.0, %v715
    %v717 = vpop.f32.mrf.mxu0
    %v718 = vadd.f32 0.0, %v717
    %719 = vdwg.mxu0
    %v720 = vmul.f32 %v637, %v205
    %v721 = vmul.f32 %v701, %v205
    %v722 = vmul.f32 %v639, %v209
    %v723 = vmul.f32 %v703, %v209
    %v724 = vadd.f32 %v720, %v722
    %v725 = vadd.f32 %v721, %v723
    %v726 = vmul.f32 %v642, %v213
    %v727 = vmul.f32 %v706, %v213
    %v728 = vadd.f32 %v724, %v726
    %v729 = vadd.f32 %v725, %v727
    %v730 = vmul.f32 %v644, %v217
    %v731 = vmul.f32 %v708, %v217
    %v732 = vadd.f32 %v728, %v730
    %v733 = vadd.f32 %v729, %v731
    %v734 = vmul.f32 %v647, %v221
    %v735 = vmul.f32 %v711, %v221
    %v736 = vadd.f32 %v732, %v734
    %v737 = vadd.f32 %v733, %v735
    %v738 = vmul.f32 %v649, %v225
    %v739 = vmul.f32 %v713, %v225
    %v740 = vadd.f32 %v736, %v738
    %v741 = vadd.f32 %v737, %v739
    %v742 = vmul.f32 %v652, %v229
    %v743 = vmul.f32 %v716, %v229
    %v744 = vadd.f32 %v740, %v742
    %v745 = vadd.f32 %v741, %v743
    %v746 = vmul.f32 %v654, %v233
    %v747 = vmul.f32 %v718, %v233
    %v748 = vadd.f32 %v744, %v746
    %v749 = vadd.f32 %v745, %v747
    %v750 = vpack.c.bf16 %v749, %v748
    %v751 = vperm.slane %v51, 2
    %v752 = vunpack.c.h.b16 %v53
    %v753 = vunpack.c.h.b16 %v56
    %v754 = vunpack.c.h.b16 %v59
    %v755 = vunpack.c.h.b16 %v62
    %v756 = vpack.c.b16 %v753, %v752
    %v757 = vpack.c.b16 %v755, %v754
    %v761 = vsel %vm64, %v750, 0
    %763 = vmatpush.bf16.msra.mxu0 0
    %764 = vmatpush.bf16.msra.mxu0 0
    %765 = vmatpush.bf16.msra.mxu0 0
    %766 = vmatpush.bf16.msra.mxu0 0
    %767 = vmatpush.bf16.msra.mxu0 0
    %768 = vmatpush.bf16.msra.mxu0 0
    %769 = vmatpush.bf16.msra.mxu0 %v757
    %770 = vmatpush.bf16.msra.mxu0 %v756
    %771 = vmatmul.bf16.gmra.mxu0 %v761
    %v772 = vpop.f32.mrf.mxu0
    %v773 = vadd.f32 %v751, %v772
    %v774 = vpop.f32.mrf.mxu0
    %v775 = vadd.f32 %v751, %v774
    %776 = vdwg.mxu0
    %v777 = vadd.f32 %v773, %v120
    %v778 = vadd.f32 %v775, %v121
    %v779 = vsel %vm64, %v777, 0.0
    %780 = vadd.xlane.f32.xlu0 %v779
    %v781 = vpop.xlane.xlu0 %780
    %v782 = vsel %vm64, %v778, 0.0
    %783 = vadd.xlane.f32.xlu0 %v782
    %v784 = vpop.xlane.xlu0 %783
    %v785 = vmul.f32 %v781, %v77
    %v786 = vmul.f32 %v784, %v77
    %v787 = vsub.f32 %v777, %v785
    %v788 = vsub.f32 %v778, %v786
    %v789 = vmul.f32 %v787, %v787
    %v790 = vmul.f32 %v788, %v788
    %v791 = vsel %vm64, %v789, 0.0
    %792 = vadd.xlane.f32.xlu0 %v791
    %v793 = vpop.xlane.xlu0 %792
    %v794 = vsel %vm64, %v790, 0.0
    %795 = vadd.xlane.f32.xlu0 %v794
    %v796 = vpop.xlane.xlu0 %795
    %v797 = vmul.f32 %v793, %v77
    %v798 = vmul.f32 %v796, %v77
    %v799 = vadd.f32 %v797, 1e-05
    %v800 = vadd.f32 %v798, 1e-05
    %v801 = vrsqrt.pop %v799
    %v802 = vmul.f32 %v801, %v799
    %v803 = vmul.f32 %v802, %v801
    %v804 = vmul.f32 0.5, %v803
    %v805 = vsub.f32 1.5, %v804
    %v806 = vmul.f32 %v801, %v805
    %vm807 = vweird.f32 %v799
    %vm808 = vweird.f32 %v801
    %vm809 = vmor %vm807, %vm808
    %v810 = vsel %vm809, %v801, %v806
    %v811 = vrsqrt.pop %v800
    %v812 = vmul.f32 %v811, %v800
    %v813 = vmul.f32 %v812, %v811
    %v814 = vmul.f32 0.5, %v813
    %v815 = vsub.f32 1.5, %v814
    %v816 = vmul.f32 %v811, %v815
    %vm817 = vweird.f32 %v800
    %vm818 = vweird.f32 %v811
    %vm819 = vmor %vm817, %vm818
    %v820 = vsel %vm819, %v811, %v816
    %v821 = vmul.f32 %v787, %v810
    %v822 = vmul.f32 %v788, %v820
    %v823 = vperm.slane %v51, 3
    %v824 = vmul.f32 %v821, %v823
    %v825 = vmul.f32 %v822, %v823
    %v826 = vperm.slane %v51, 4
    %v827 = vadd.f32 %v824, %v826
    %v828 = vadd.f32 %v825, %v826
    %v829 = vpack.c.bf16 %v828, %v827
    %v830 = vperm.slane %v51, 6
    %v835 = vunpack.c.l.b16 %v54
    %v836 = vunpack.c.l.b16 %v57
    %v837 = vunpack.c.l.b16 %v60
    %v838 = vunpack.c.l.b16 %v63
    %v839 = vpack.c.b16 %v836, %v835
    %v840 = vpack.c.b16 %v838, %v837
    %v844 = vsel %vm64, %v829, 0
    %846 = vmatpush.bf16.msra.mxu0 0
    %847 = vmatpush.bf16.msra.mxu0 0
    %848 = vmatpush.bf16.msra.mxu0 0
    %849 = vmatpush.bf16.msra.mxu0 0
    %850 = vmatpush.bf16.msra.mxu0 0
    %851 = vmatpush.bf16.msra.mxu0 0
    %852 = vmatpush.bf16.msra.mxu0 %v840
    %853 = vmatpush.bf16.msra.mxu0 %v839
    %854 = vmatmul.bf16.gmra.mxu0 %v844
    %v855 = vpop.f32.mrf.mxu0
    %v856 = vadd.f32 %v830, %v855
    %v857 = vpop.f32.mrf.mxu0
    %v858 = vadd.f32 %v830, %v857
    %859 = vdwg.mxu0
    %v860 = vmul.f32 %v856, 0.5
    %v861 = vmul.f32 %v858, 0.5
    %v862 = vmul.f32 %v856, 0.044715
    %v863 = vmul.f32 %v858, 0.044715
    %v864 = vmul.f32 %v862, %v856
    %v865 = vmul.f32 %v863, %v858
    %v866 = vmul.f32 %v864, %v856
    %v867 = vmul.f32 %v865, %v858
    %v868 = vadd.f32 %v856, %v866
    %v869 = vadd.f32 %v858, %v867
    %v870 = vmul.f32 %v868, 0.7978846
    %v871 = vmul.f32 %v869, 0.7978846
    %v872 = vtanh.pop %v870
    %v873 = vtanh.pop %v871
    %v874 = vadd.f32 %v872, 1.0
    %v875 = vadd.f32 %v873, 1.0
    %v876 = vmul.f32 %v860, %v874
    %v877 = vmul.f32 %v861, %v875
    %v878 = vpack.c.bf16 %v877, %v876
    %v879 = vld [vmem:[%s3] sm:$0xf]
    %v880 = vld [vmem:[%s3 + $0x4] sm:$0xf]
    %v881 = vld [vmem:[%s3 + $0x8] sm:$0xf]
    %v882 = vld [vmem:[%s3 + $0xc] sm:$0xf]
    %v883 = vld [vmem:[%s3 + $0x10] sm:$0xf]
    %v884 = vld [vmem:[%s3 + $0x14] sm:$0xf]
    %v885 = vld [vmem:[%s3 + $0x18] sm:$0xf]
    %v886 = vld [vmem:[%s3 + $0x1c] sm:$0xf]
    %v887 = vld [vmem:[%s3 + $0x20] sm:$0xf]
    %v888 = vld [vmem:[%s3 + $0x24] sm:$0xf]
    %v889 = vld [vmem:[%s3 + $0x28] sm:$0xf]
    %v890 = vld [vmem:[%s3 + $0x2c] sm:$0xf]
    %v891 = vld [vmem:[%s3 + $0x30] sm:$0xf]
    %v892 = vld [vmem:[%s3 + $0x34] sm:$0xf]
    %v893 = vld [vmem:[%s3 + $0x38] sm:$0xf]
    %v894 = vld [vmem:[%s3 + $0x3c] sm:$0xf]
    %v895 = vperm.slane %v51, 5
    %v912 = vunpack.c.l.b16 %v879
    %v913 = vunpack.c.l.b16 %v880
    %v914 = vunpack.c.l.b16 %v881
    %v915 = vunpack.c.l.b16 %v882
    %v916 = vunpack.c.l.b16 %v883
    %v917 = vunpack.c.l.b16 %v884
    %v918 = vunpack.c.l.b16 %v885
    %v919 = vunpack.c.l.b16 %v886
    %v920 = vunpack.c.l.b16 %v887
    %v921 = vunpack.c.l.b16 %v888
    %v922 = vunpack.c.l.b16 %v889
    %v923 = vunpack.c.l.b16 %v890
    %v924 = vunpack.c.l.b16 %v891
    %v925 = vunpack.c.l.b16 %v892
    %v926 = vunpack.c.l.b16 %v893
    %v927 = vunpack.c.l.b16 %v894
    %v928 = vpack.c.b16 %v913, %v912
    %v929 = vpack.c.b16 %v915, %v914
    %v930 = vpack.c.b16 %v917, %v916
    %v931 = vpack.c.b16 %v919, %v918
    %v932 = vpack.c.b16 %v921, %v920
    %v933 = vpack.c.b16 %v923, %v922
    %v934 = vpack.c.b16 %v925, %v924
    %v935 = vpack.c.b16 %v927, %v926
    %944 = vmatpush.bf16.msra.mxu0 %v935
    %945 = vmatpush.bf16.msra.mxu0 %v934
    %946 = vmatpush.bf16.msra.mxu0 %v933
    %947 = vmatpush.bf16.msra.mxu0 %v932
    %948 = vmatpush.bf16.msra.mxu0 %v931
    %949 = vmatpush.bf16.msra.mxu0 %v930
    %950 = vmatpush.bf16.msra.mxu0 %v929
    %951 = vmatpush.bf16.msra.mxu0 %v928
    %952 = vmatmul.bf16.gmra.mxu0 %v878
    %v953 = vpop.f32.mrf.mxu0
    %v954 = vadd.f32 %v895, %v953
    %v955 = vpop.f32.mrf.mxu0
    %v956 = vadd.f32 %v895, %v955
    %957 = vdwg.mxu0
    %v958 = vadd.f32 %v954, %v827
    %v959 = vadd.f32 %v956, %v828
    %960 = vst.msk [vmem:[#allocation7] sm:$0xff] %vm64, %v958
    %961 = vst.msk [vmem:[#allocation7 + $0x8] sm:$0xff] %vm64, %v959
    // Predicated region
    $region26: #{transformer_encoder_block.1} parent=1 // pred_check
      _
    $region27: #{transformer_encoder_block.1} parent=1 // pred_check_branch
      %963 = sbr.rel (0) target = $region29
    $region28: #{transformer_encoder_block.1} parent=1 // pred_region
      %965 = vsyncadd [#allocation4], 0
      %s966 = sshll.u32 [#allocation7], 4
      %s967 = int_to_ptr.vmem [resolvable:$true] %s966
      %s968 = sshll.u32 %s4, 4
      %s969 = int_to_ptr.hbm [resolvable:$true] %s968
      %974 = dma.vmem_to_hbm [thread:$0]  %s967, 256, %s969, [#allocation4], 128, 128, 8
    $region29: #{transformer_encoder_block.1} parent=1 // pred_fallthru
      _
    // Predicated region
    $region30: #{transformer_encoder_block.1} parent=1 // pred_check
      _
    $region31: #{transformer_encoder_block.1} parent=1 // pred_check_branch
      %976 = sbr.rel (0) target = $region33
    $region32: #{transformer_encoder_block.1} parent=1 // pred_region
      %978 = dma.done [#allocation4], 256
    $region33: #{transformer_encoder_block.1} parent=1 // pred_fallthru
      _
    %979 = vsyncpa [#allocation3], 1
    %980 = vsyncpa [#allocation6], 1
    %981 = vsyncpa [#allocation4], 1

</llo_original>
